<compile_context>
chip_gen: v6e
topology: v6e:2x2x1
jax: 0.10.0
libtpu: 0.0.40
codegen_flags: <defaults>
</compile_context>

<pallas_src>
import functools

import jax
import jax.numpy as jnp
from jax.experimental import pallas as pl
from jax.experimental.pallas import tpu as pltpu

H1, H2 = 64, 32  # hidden sizes of fc1 / fc2


def _mlp_kernel(x_ref, w1_ref, b1_ref, w2_ref, b2_ref, w3_ref, b3_ref, o_ref):
    f32 = jnp.float32
    # fc1 + ReLU  (MXU, f32 accumulation; bias/activation math in f32)
    h1 = jnp.dot(x_ref[...], w1_ref[...], preferred_element_type=f32)
    h1 = jnp.maximum(h1 + b1_ref[...].astype(f32), 0.0)
    # Dropout(p=0.3) is identity at inference time (nn.Dropout in eval mode).
    # TODO(synk): training-mode stochastic dropout not implemented (inference kernel).
    # fc2 + ReLU
    h2 = jnp.dot(h1.astype(w2_ref.dtype), w2_ref[...], preferred_element_type=f32)
    h2 = jnp.maximum(h2 + b2_ref[...].astype(f32), 0.0)
    # fc3 has out_features=1: use a VPU multiply + XLU lane-reduce instead of a
    # degenerate N=1 MXU matmul; b3 is read as a scalar from SMEM.
    w3_row = w3_ref[...].astype(f32)                                  # (1, H2)
    logits = jnp.sum(h2 * w3_row, axis=-1, keepdims=True) + b3_ref[0, 0]
    o_ref[...] = jax.nn.sigmoid(logits).astype(o_ref.dtype)


def _round_up(x, m):
    return (x + m - 1) // m * m


@functools.partial(jax.jit, static_argnames=("block_rows", "compute_dtype"))
def nba_block_model_forward(x, params, *, block_rows=1024,
                            compute_dtype=jnp.bfloat16):
    """x: (B, input_dim) float32. params: dict of w1,b1,w2,b2,w3,b3 (float32 masters)."""
    B, D = x.shape
    # Batch tile: multiple of 8 sublanes, capped at `block_rows` so the
    # double-buffered x tiles stay far below scoped VMEM on every generation.
    tm = min(block_rows, _round_up(B, 8))
    bp = _round_up(B, tm)
    if bp != B:
        x = jnp.pad(x, ((0, bp - B), (0, 0)))

    cdt = compute_dtype
    xb = x.astype(cdt)
    w1 = params["w1"].astype(cdt)
    w2 = params["w2"].astype(cdt)
    w3 = params["w3"].reshape(1, H2).astype(cdt)          # row vector for the reduce
    b1 = params["b1"].astype(jnp.float32)
    b2 = params["b2"].astype(jnp.float32)
    b3 = params["b3"].reshape(1, 1).astype(jnp.float32)

    weight_bytes = sum(int(a.size) * a.dtype.itemsize
                       for a in (w1, b1, w2, b2, w3, b3))
    cost = pl.CostEstimate(
        flops=2 * bp * (D * H1 + H1 * H2 + H2),
        transcendentals=bp,
        bytes_accessed=bp * (D * xb.dtype.itemsize + 4) + weight_bytes,
    )

    grid = (bp // tm,)
    out = pl.pallas_call(
        _mlp_kernel,
        out_shape=jax.ShapeDtypeStruct((bp, 1), jnp.float32),
        grid=grid,
        in_specs=[
            pl.BlockSpec((tm, D), lambda i: (i, 0)),            # x: tiled over batch
            pl.BlockSpec((D, H1), lambda i: (0, 0)),            # w1: resident
            pl.BlockSpec((1, H1), lambda i: (0, 0)),            # b1: resident
            pl.BlockSpec((H1, H2), lambda i: (0, 0)),           # w2: resident
            pl.BlockSpec((1, H2), lambda i: (0, 0)),            # b2: resident
            pl.BlockSpec((1, H2), lambda i: (0, 0)),            # w3 row: resident
            pl.BlockSpec(memory_space=pltpu.MemorySpace.SMEM),  # b3 scalar
        ],
        out_specs=pl.BlockSpec((tm, 1), lambda i: (i, 0)),
        compiler_params=pltpu.CompilerParams(
            dimension_semantics=("parallel",),
        ),
        cost_estimate=cost,
    )(xb, w1, b1, w2, b2, w3, b3)
    return out[:B]


def init_params(key, input_dim):
    """Deterministic synthetic init matching nn.Linear shapes.
    Weights stored as (in, out) = transpose of PyTorch's (out, in)."""
    k1, k2, k3, k4, k5, k6 = jax.random.split(key, 6)

    def lin(kw, kb, fan_in, fan_out):
        bound = 1.0 / jnp.sqrt(fan_in)
        w = jax.random.uniform(kw, (fan_in, fan_out), jnp.float32, -bound, bound)
        b = jax.random.uniform(kb, (1, fan_out), jnp.float32, -bound, bound)
        return w, b

    w1, b1 = lin(k1, k2, input_dim, H1)
    w2, b2 = lin(k3, k4, H1, H2)
    w3, b3 = lin(k5, k6, H2, 1)
    return dict(w1=w1, b1=b1, w2=w2, b2=b2, w3=w3, b3=b3)


def reference_forward(x, p, compute_dtype=jnp.bfloat16):
    """Pure-JAX reference mirroring the kernel's quantization pattern."""
    f32 = jnp.float32
    xb = x.astype(compute_dtype).astype(f32)
    w1 = p["w1"].astype(compute_dtype).astype(f32)
    w2 = p["w2"].astype(compute_dtype).astype(f32)
    w3 = p["w3"].reshape(1, H2).astype(compute_dtype).astype(f32)
    b1 = p["b1"].astype(f32)
    b2 = p["b2"].astype(f32)
    b3 = p["b3"].reshape(1, 1).astype(f32)
    h1 = jnp.maximum(xb @ w1 + b1, 0.0)
    h1 = h1.astype(compute_dtype).astype(f32)
    h2 = jnp.maximum(h1 @ w2 + b2, 0.0)
    logits = jnp.sum(h2 * w3, axis=-1, keepdims=True) + b3
    return jax.nn.sigmoid(logits)


if __name__ == "__main__":
    key = jax.random.PRNGKey(0)
    kx, kp, kx2 = jax.random.split(key, 3)

    B, INPUT_DIM = 8, 32
    x = jax.random.normal(kx, (B, INPUT_DIM), jnp.float32)
    params = init_params(kp, INPUT_DIM)

    out = nba_block_model_forward(x, params)
    out = jax.block_until_ready(out)
    ref = reference_forward(x, params)
    assert out.shape == (B, 1)
    assert jnp.allclose(out, ref, atol=1e-4, rtol=1e-4)

    # Exercise the multi-tile grid path (grid > 1, resident weights, padding).
    B2 = 24
    x2 = jax.random.normal(kx2, (B2, INPUT_DIM), jnp.float32)
    out2 = nba_block_model_forward(x2, params, block_rows=8)
    out2 = jax.block_until_ready(out2)
    ref2 = reference_forward(x2, params)
    assert out2.shape == (B2, 1)
    assert jnp.allclose(out2, ref2, atol=1e-4, rtol=1e-4)

    print("KERNEL_OK")
</pallas_src>

<mosaic_0001>
module attributes {stable_mosaic.version = 11 : i64} {
  func.func @_mlp_kernel(%arg0: i32, %arg1: memref<8x32xbf16, #tpu.memory_space<vmem>>, %arg2: memref<32x64xbf16, #tpu.memory_space<vmem>>, %arg3: memref<1x64xf32, #tpu.memory_space<vmem>>, %arg4: memref<64x32xbf16, #tpu.memory_space<vmem>>, %arg5: memref<1x32xf32, #tpu.memory_space<vmem>>, %arg6: memref<1x32xbf16, #tpu.memory_space<vmem>>, %arg7: memref<1x1xf32, #tpu.memory_space<smem>>, %arg8: memref<8x1xf32, #tpu.memory_space<vmem>>) attributes {dimension_semantics = [#tpu.dimension_semantics<parallel>], iteration_bounds = array<i64: 1>, scalar_prefetch = 0 : i64, scratch_operands = 0 : i64, tpu.core_type = #tpu.core_type<tc>, window_params = [{transform_indices = @transform_0, window_bounds = array<i64: 8, 32>}, {pipeline_mode = #tpu.pipeline_mode<synchronous>, transform_indices = @transform_1, window_bounds = array<i64: 32, 64>}, {pipeline_mode = #tpu.pipeline_mode<synchronous>, transform_indices = @transform_2, window_bounds = array<i64: 1, 64>}, {pipeline_mode = #tpu.pipeline_mode<synchronous>, transform_indices = @transform_3, window_bounds = array<i64: 64, 32>}, {pipeline_mode = #tpu.pipeline_mode<synchronous>, transform_indices = @transform_4, window_bounds = array<i64: 1, 32>}, {pipeline_mode = #tpu.pipeline_mode<synchronous>, transform_indices = @transform_5, window_bounds = array<i64: 1, 32>}, {transform_indices = @transform_6, window_bounds = array<i64: 1, 1>}, {transform_indices = @transform_7, window_bounds = array<i64: 8, 1>}]} {
    %c0 = arith.constant 0 : index
    %c0_0 = arith.constant 0 : index
    %0 = vector.load %arg1[%c0, %c0_0] : memref<8x32xbf16, #tpu.memory_space<vmem>>, vector<8x32xbf16>
    %c0_1 = arith.constant 0 : index
    %c0_2 = arith.constant 0 : index
    %1 = vector.load %arg2[%c0_1, %c0_2] : memref<32x64xbf16, #tpu.memory_space<vmem>>, vector<32x64xbf16>
    %cst = arith.constant dense<0.000000e+00> : vector<8x64xf32>
    %2 = tpu.matmul %0, %1, %cst {dimension_numbers = #tpu.dot_dimension_numbers<[1], [0], [0], [1], [0, 0, 1, 1], [], []>} : vector<8x32xbf16>, vector<32x64xbf16>, vector<8x64xf32> -> vector<8x64xf32>
    %c0_3 = arith.constant 0 : index
    %c0_4 = arith.constant 0 : index
    %3 = vector.load %arg3[%c0_3, %c0_4] : memref<1x64xf32, #tpu.memory_space<vmem>>, vector<1x64xf32>
    %4 = vector.broadcast %3 : vector<1x64xf32> to vector<8x64xf32>
    %5 = arith.addf %2, %4 : vector<8x64xf32>
    %cst_5 = arith.constant 0.000000e+00 : f32
    %6 = vector.broadcast %cst_5 : f32 to vector<8x64xf32>
    %7 = arith.maximumf %5, %6 : vector<8x64xf32>
    %8 = arith.truncf %7 : vector<8x64xf32> to vector<8x64xbf16>
    %c0_6 = arith.constant 0 : index
    %c0_7 = arith.constant 0 : index
    %9 = vector.load %arg4[%c0_6, %c0_7] : memref<64x32xbf16, #tpu.memory_space<vmem>>, vector<64x32xbf16>
    %cst_8 = arith.constant dense<0.000000e+00> : vector<8x32xf32>
    %10 = tpu.matmul %8, %9, %cst_8 {dimension_numbers = #tpu.dot_dimension_numbers<[1], [0], [0], [1], [0, 0, 1, 1], [], []>} : vector<8x64xbf16>, vector<64x32xbf16>, vector<8x32xf32> -> vector<8x32xf32>
    %c0_9 = arith.constant 0 : index
    %c0_10 = arith.constant 0 : index
    %11 = vector.load %arg5[%c0_9, %c0_10] : memref<1x32xf32, #tpu.memory_space<vmem>>, vector<1x32xf32>
    %12 = vector.broadcast %11 : vector<1x32xf32> to vector<8x32xf32>
    %13 = arith.addf %10, %12 : vector<8x32xf32>
    %cst_11 = arith.constant 0.000000e+00 : f32
    %14 = vector.broadcast %cst_11 : f32 to vector<8x32xf32>
    %15 = arith.maximumf %13, %14 : vector<8x32xf32>
    %c0_12 = arith.constant 0 : index
    %c0_13 = arith.constant 0 : index
    %16 = vector.load %arg6[%c0_12, %c0_13] : memref<1x32xbf16, #tpu.memory_space<vmem>>, vector<1x32xbf16>
    %17 = arith.extf %16 : vector<1x32xbf16> to vector<1x32xf32>
    %18 = vector.broadcast %17 : vector<1x32xf32> to vector<8x32xf32>
    %19 = arith.mulf %15, %18 : vector<8x32xf32>
    %cst_14 = arith.constant dense<0.000000e+00> : vector<8xf32>
    %20 = vector.multi_reduction <add>, %19, %cst_14 [1] : vector<8x32xf32> to vector<8xf32>
    %21 = vector.shape_cast %20 : vector<8xf32> to vector<8x1xf32>
    %c0_15 = arith.constant 0 : index
    %c0_16 = arith.constant 0 : index
    %22 = memref.load %arg7[%c0_15, %c0_16] : memref<1x1xf32, #tpu.memory_space<smem>>
    %23 = vector.broadcast %22 : f32 to vector<8x1xf32>
    %24 = arith.addf %21, %23 : vector<8x1xf32>
    %25 = arith.negf %24 : vector<8x1xf32>
    %26 = math.exp %25 : vector<8x1xf32>
    %cst_17 = arith.constant 1.000000e+00 : f32
    %27 = vector.broadcast %cst_17 : f32 to vector<8x1xf32>
    %28 = arith.addf %27, %26 : vector<8x1xf32>
    %29 = arith.divf %27, %28 : vector<8x1xf32>
    %c0_18 = arith.constant 0 : index
    %c0_19 = arith.constant 0 : index
    %30 = vector.load %arg8[%c0_18, %c0_19] : memref<8x1xf32, #tpu.memory_space<vmem>>, vector<8x1xf32>
    tpu.vector_store %arg8[%c0_18, %c0_19], %29 {strides = array<i32>} : memref<8x1xf32, #tpu.memory_space<vmem>>, vector<8x1xf32>,
    return
  }
  func.func @transform_0(%arg0: i32) -> (i32, i32) {
    %c0_i32 = arith.constant 0 : i32
    %c0_i32_0 = arith.constant 0 : i32
    return %arg0, %c0_i32 : i32, i32
  }
  func.func @transform_1(%arg0: i32) -> (i32, i32) {
    %c0_i32 = arith.constant 0 : i32
    %c0_i32_0 = arith.constant 0 : i32
    %c0_i32_1 = arith.constant 0 : i32
    return %c0_i32, %c0_i32_0 : i32, i32
  }
  func.func @transform_2(%arg0: i32) -> (i32, i32) {
    %c0_i32 = arith.constant 0 : i32
    %c0_i32_0 = arith.constant 0 : i32
    %c0_i32_1 = arith.constant 0 : i32
    return %c0_i32, %c0_i32_0 : i32, i32
  }
  func.func @transform_3(%arg0: i32) -> (i32, i32) {
    %c0_i32 = arith.constant 0 : i32
    %c0_i32_0 = arith.constant 0 : i32
    %c0_i32_1 = arith.constant 0 : i32
    return %c0_i32, %c0_i32_0 : i32, i32
  }
  func.func @transform_4(%arg0: i32) -> (i32, i32) {
    %c0_i32 = arith.constant 0 : i32
    %c0_i32_0 = arith.constant 0 : i32
    %c0_i32_1 = arith.constant 0 : i32
    return %c0_i32, %c0_i32_0 : i32, i32
  }
  func.func @transform_5(%arg0: i32) -> (i32, i32) {
    %c0_i32 = arith.constant 0 : i32
    %c0_i32_0 = arith.constant 0 : i32
    %c0_i32_1 = arith.constant 0 : i32
    return %c0_i32, %c0_i32_0 : i32, i32
  }
  func.func @transform_6(%arg0: i32) -> (i32, i32) {
    %c0_i32 = arith.constant 0 : i32
    %c0_i32_0 = arith.constant 0 : i32
    %c0_i32_1 = arith.constant 0 : i32
    return %c0_i32, %c0_i32_0 : i32, i32
  }
  func.func @transform_7(%arg0: i32) -> (i32, i32) {
    %c0_i32 = arith.constant 0 : i32
    %c0_i32_0 = arith.constant 0 : i32
    return %arg0, %c0_i32 : i32, i32
  }
}

</mosaic_0001>

<llo_original>
// kernel: nba_block_model_forward.1
$region0: #{nba_block_model_forward.1}
  #allocation0 [shape = 'u32[]', space=smem, size = 0x4, offset = 0x4, fixed_abs, tag = 'smem constant byte address 0x4 - core index']
  #allocation1 [shape = 'u32[144,128]{1,0:T(1,128)}', space=vmem, size = 0x12000, scoped, tag = 'internal scratch']
  #allocation2 [shape = 'f32[1,1]{1,0:T(1,128)S(6)}', space=smem, size = 0x200, scoped, tag = 'scoped memory for nba_block_model_forward.1']
  %s0 = inlined_call_operand.vmem [shape: bf16[8,32], index: 0, kind: input, shape index: {}]
  %s1 = inlined_call_operand.vmem [shape: bf16[32,64], index: 1, kind: input, shape index: {}]
  %s2 = inlined_call_operand.vmem [shape: f32[1,64], index: 2, kind: input, shape index: {}]
  %s3 = inlined_call_operand.vmem [shape: bf16[64,32], index: 3, kind: input, shape index: {}]
  %s4 = inlined_call_operand.vmem [shape: f32[1,32], index: 4, kind: input, shape index: {}]
  %s5 = inlined_call_operand.vmem [shape: bf16[1,32], index: 5, kind: input, shape index: {}]
  %s6 = inlined_call_operand.<no memory space> [shape: f32[1,1], index: 6, kind: input, shape index: {}]
  %s7 = inlined_call_operand.vmem [shape: f32[8,1], index: 7, kind: output, shape index: {}]
  %s8 = sld [smem:[#allocation0]]
  $region38: #{nba_block_model_forward.1} parent=0
    _
  %s10 = ssub.s32 1, %s8
  %s11 = scalar_select 0, %s10, %s8
  %12 = sst [smem:[#allocation2]] %s6
  // Predicated region
  $region2: #{nba_block_model_forward.1} parent=0 // pred_check
    _
  $region3: #{nba_block_model_forward.1} parent=0 // pred_check_branch
    %14 = sbr.rel (0) target = $region5
  $region4: #{nba_block_model_forward.1} parent=0 // pred_region
    _
  $region5: #{nba_block_model_forward.1} parent=0 // pred_fallthru
    _
  // Predicated region
  $region6: #{nba_block_model_forward.1} parent=0 // pred_check
    _
  $region7: #{nba_block_model_forward.1} parent=0 // pred_check_branch
    %16 = sbr.rel (0) target = $region9
  $region8: #{nba_block_model_forward.1} parent=0 // pred_region
    _
  $region9: #{nba_block_model_forward.1} parent=0 // pred_fallthru
    _
  // Predicated region
  $region10: #{nba_block_model_forward.1} parent=0 // pred_check
    _
  $region11: #{nba_block_model_forward.1} parent=0 // pred_check_branch
    %18 = sbr.rel (0) target = $region13
  $region12: #{nba_block_model_forward.1} parent=0 // pred_region
    _
  $region13: #{nba_block_model_forward.1} parent=0 // pred_fallthru
    _
  // Predicated region
  $region14: #{nba_block_model_forward.1} parent=0 // pred_check
    _
  $region15: #{nba_block_model_forward.1} parent=0 // pred_check_branch
    %20 = sbr.rel (0) target = $region17
  $region16: #{nba_block_model_forward.1} parent=0 // pred_region
    _
  $region17: #{nba_block_model_forward.1} parent=0 // pred_fallthru
    _
  // Predicated region
  $region18: #{nba_block_model_forward.1} parent=0 // pred_check
    _
  $region19: #{nba_block_model_forward.1} parent=0 // pred_check_branch
    %22 = sbr.rel (0) target = $region21
  $region20: #{nba_block_model_forward.1} parent=0 // pred_region
    _
  $region21: #{nba_block_model_forward.1} parent=0 // pred_fallthru
    _
  // Predicated region
  $region22: #{nba_block_model_forward.1} parent=0 // pred_check
    _
  $region23: #{nba_block_model_forward.1} parent=0 // pred_check_branch
    %24 = sbr.rel (0) target = $region25
  $region24: #{nba_block_model_forward.1} parent=0 // pred_region
    _
  $region25: #{nba_block_model_forward.1} parent=0 // pred_fallthru
    _
  // Predicated region
  $region26: #{nba_block_model_forward.1} parent=0 // pred_check
    _
  $region27: #{nba_block_model_forward.1} parent=0 // pred_check_branch
    %26 = sbr.rel (0) target = $region29
  $region28: #{nba_block_model_forward.1} parent=0 // pred_region
    _
  $region29: #{nba_block_model_forward.1} parent=0 // pred_fallthru
    _
  %v28 = vld [vmem:[%s0] sm:$0xf]
  %v29 = vld [vmem:[%s1] sm:$0xf]
  %v30 = vld [vmem:[%s1 + $0x4] sm:$0xf]
  %v31 = vld [vmem:[%s1 + $0x8] sm:$0xf]
  %v32 = vld [vmem:[%s1 + $0xc] sm:$0xf]
  %v33 = vld [vmem:[%s2] sm:$0x1]
  %v35 = vlaneseq
  %v36 = vshrl.u32 %v35, 7
  %v37 = vsub.s32 0, %v36
  %v38 = vrot.slane %v33, %v37
  %v44 = vunpack.c.l.b16 %v29
  %v45 = vunpack.c.l.b16 %v30
  %v46 = vunpack.c.l.b16 %v31
  %v47 = vunpack.c.l.b16 %v32
  %v48 = vpack.c.b16 %v45, %v44
  %v49 = vpack.c.b16 %v47, %v46
  %vm52 = vcmask 261120
  %v54 = vsel %vm52, %v28, 0
  %56 = vmatprep.subr.bf16.mxu0 0
  %57 = vmatpush1.bf16.msra.mxu0 0
  %58 = vmatprep.subr.bf16.mxu0 0
  %59 = vmatpush1.bf16.msra.mxu0 0
  %60 = vmatprep.subr.bf16.mxu0 0
  %61 = vmatpush1.bf16.msra.mxu0 0
  %62 = vmatprep.subr.bf16.mxu0 0
  %63 = vmatpush1.bf16.msra.mxu0 0
  %64 = vmatprep.subr.bf16.mxu0 0
  %65 = vmatpush1.bf16.msra.mxu0 0
  %66 = vmatprep.subr.bf16.mxu0 0
  %67 = vmatpush1.bf16.msra.mxu0 0
  %68 = vmatprep.subr.bf16.mxu0 0
  %69 = vmatpush1.bf16.msra.mxu0 %v49
  %70 = vmatprep.subr.bf16.mxu0 0
  %71 = vmatpush1.bf16.msra.mxu0 %v48
  %72 = vmatprep.subr.bf16.mxu0 0
  %73 = vmatpush2.bf16.msra.mxu0 0
  %74 = vmatprep.subr.bf16.mxu0 0
  %75 = vmatpush2.bf16.msra.mxu0 0
  %76 = vmatprep.subr.bf16.mxu0 0
  %77 = vmatpush2.bf16.msra.mxu0 0
  %78 = vmatprep.subr.bf16.mxu0 0
  %79 = vmatpush2.bf16.msra.mxu0 0
  %80 = vmatprep.subr.bf16.mxu0 0
  %81 = vmatpush2.bf16.msra.mxu0 0
  %82 = vmatprep.subr.bf16.mxu0 0
  %83 = vmatpush2.bf16.msra.mxu0 0
  %84 = vmatprep.subr.bf16.mxu0 0
  %85 = vmatpush2.bf16.msra.mxu0 0
  %86 = vmatprep.subr.bf16.mxu0 0
  %87 = vmatpush2.bf16.msra.mxu0 0
  %88 = vmatprep.mubr.bf16.mxu0 0
  %89 = vmatmul.mubr.bf16.gmra.mxu0 %v54
  %v90 = vpop.f32.mrf.mxu0
  %v91 = vadd.f32 %v38, %v90
  %v92 = vpop.f32.mrf.mxu0
  %v93 = vpop.f32.mrf.mxu0
  %v94 = vpop.f32.mrf.mxu0
  %95 = vdwg.mxu0
  %v96 = vmax.f32 %v91, 0.0
  %v97 = vpack.c.bf16 %v96, %v96
  %v98 = vld [vmem:[%s3] sm:$0xf]
  %v99 = vld [vmem:[%s3 + $0x4] sm:$0xf]
  %v100 = vld [vmem:[%s3 + $0x8] sm:$0xf]
  %v101 = vld [vmem:[%s3 + $0xc] sm:$0xf]
  %v102 = vld [vmem:[%s3 + $0x10] sm:$0xf]
  %v103 = vld [vmem:[%s3 + $0x14] sm:$0xf]
  %v104 = vld [vmem:[%s3 + $0x18] sm:$0xf]
  %v105 = vld [vmem:[%s3 + $0x1c] sm:$0xf]
  %v106 = vld [vmem:[%s4] sm:$0x1]
  %v108 = vlaneseq
  %v109 = vshrl.u32 %v108, 7
  %v110 = vsub.s32 0, %v109
  %v111 = vrot.slane %v106, %v110
  %v121 = vunpack.c.l.b16 %v98
  %v122 = vunpack.c.l.b16 %v99
  %v123 = vunpack.c.l.b16 %v100
  %v124 = vunpack.c.l.b16 %v101
  %v125 = vunpack.c.l.b16 %v102
  %v126 = vunpack.c.l.b16 %v103
  %v127 = vunpack.c.l.b16 %v104
  %v128 = vunpack.c.l.b16 %v105
  %v129 = vpack.c.b16 %v122, %v121
  %v130 = vpack.c.b16 %v124, %v123
  %v131 = vpack.c.b16 %v126, %v125
  %v132 = vpack.c.b16 %v128, %v127
  %vm137 = vcmask 523264
  %v139 = vsel %vm137, %v97, 0
  %141 = vmatprep.subr.bf16.mxu0 0
  %142 = vmatpush1.bf16.msra.mxu0 0
  %143 = vmatprep.subr.bf16.mxu0 0
  %144 = vmatpush1.bf16.msra.mxu0 0
  %145 = vmatprep.subr.bf16.mxu0 0
  %146 = vmatpush1.bf16.msra.mxu0 0
  %147 = vmatprep.subr.bf16.mxu0 0
  %148 = vmatpush1.bf16.msra.mxu0 0
  %149 = vmatprep.subr.bf16.mxu0 0
  %150 = vmatpush1.bf16.msra.mxu0 %v132
  %151 = vmatprep.subr.bf16.mxu0 0
  %152 = vmatpush1.bf16.msra.mxu0 %v131
  %153 = vmatprep.subr.bf16.mxu0 0
  %154 = vmatpush1.bf16.msra.mxu0 %v130
  %155 = vmatprep.subr.bf16.mxu0 0
  %156 = vmatpush1.bf16.msra.mxu0 %v129
  %157 = vmatprep.subr.bf16.mxu0 0
  %158 = vmatpush2.bf16.msra.mxu0 0
  %159 = vmatprep.subr.bf16.mxu0 0
  %160 = vmatpush2.bf16.msra.mxu0 0
  %161 = vmatprep.subr.bf16.mxu0 0
  %162 = vmatpush2.bf16.msra.mxu0 0
  %163 = vmatprep.subr.bf16.mxu0 0
  %164 = vmatpush2.bf16.msra.mxu0 0
  %165 = vmatprep.subr.bf16.mxu0 0
  %166 = vmatpush2.bf16.msra.mxu0 0
  %167 = vmatprep.subr.bf16.mxu0 0
  %168 = vmatpush2.bf16.msra.mxu0 0
  %169 = vmatprep.subr.bf16.mxu0 0
  %170 = vmatpush2.bf16.msra.mxu0 0
  %171 = vmatprep.subr.bf16.mxu0 0
  %172 = vmatpush2.bf16.msra.mxu0 0
  %173 = vmatprep.mubr.bf16.mxu0 0
  %174 = vmatmul.mubr.bf16.gmra.mxu0 %v139
  %v175 = vpop.f32.mrf.mxu0
  %v176 = vadd.f32 %v111, %v175
  %v177 = vpop.f32.mrf.mxu0
  %v178 = vpop.f32.mrf.mxu0
  %v179 = vpop.f32.mrf.mxu0
  %180 = vdwg.mxu0
  %v181 = vmax.f32 %v176, 0.0
  %v182 = vld [vmem:[%s5] sm:$0x1]
  %v183 = vunpack.c.l.bf16 %v182
  %v184 = vlaneseq
  %v185 = vshrl.u32 %v184, 7
  %v186 = vsub.s32 0, %v185
  %v187 = vrot.slane %v183, %v186
  %v188 = vmul.f32 %v181, %v187
  %v189 = vsel %vm52, %v188, 0.0
  %190 = vadd.xlane.f32.xlu0 %v189
  %v191 = vpop.xlane.xlu0 %190
  %s192 = sld [smem:[#allocation2]]
  %v193 = vstv %s192
  %v194 = vadd.f32 %v191, %v193
  %v195 = vxor.u32 %v194, 2147483648
  %v196 = vmul.f32 %v195, 1.442695
  %v197 = vpow.pop %v196
  %v198 = vadd.f32 %v197, 1.0
  %v199 = vrcp.pop %v198
  %v200 = vmul.f32 1.0, %v199
  %vm201 = vcmask 7168
  %202 = vst.msk [vmem:[%s7] sm:$0xff] %vm201, %v200
  // Predicated region
  $region30: #{nba_block_model_forward.1} parent=0 // pred_check
    _
  $region31: #{nba_block_model_forward.1} parent=0 // pred_check_branch
    %204 = sbr.rel (0) target = $region33
  $region32: #{nba_block_model_forward.1} parent=0 // pred_region
    _
  $region33: #{nba_block_model_forward.1} parent=0 // pred_fallthru
    _
  // Predicated region
  $region34: #{nba_block_model_forward.1} parent=0 // pred_check
    _
  $region35: #{nba_block_model_forward.1} parent=0 // pred_check_branch
    %206 = sbr.rel (0) target = $region37
  $region36: #{nba_block_model_forward.1} parent=0 // pred_region
    _
  $region37: #{nba_block_model_forward.1} parent=0 // pred_fallthru
    _

</llo_original>
